<compile_context>
chip_gen: v7x
topology: tpu7x:2x2x1
jax: 0.10.0
libtpu: 0.0.40
codegen_flags: <defaults>
</compile_context>

<pallas_src>
import jax
import jax.numpy as jnp
from jax.experimental import pallas as pl
from jax.experimental.pallas import tpu as pltpu


def _full_batch_norm_kernel(x_ref, sb_ref, o_ref):
    # sb_ref row 0 = scale (= inv_std), row 1 = bias (= -mean * inv_std),
    # broadcast over the row (sublane) dimension of the x block.
    scale = sb_ref[0:1, :]
    bias = sb_ref[1:2, :]
    xf = x_ref[...].astype(jnp.float32)
    o_ref[...] = (xf * scale + bias).astype(o_ref.dtype)


def full_batch_norm(x, mean, var, *, block_rows=None, block_cols=None):
    """Apply (x - mean) / sqrt(var + 1e-5) with a Pallas TPU kernel.

    x:    [N, D]
    mean: [D]
    var:  [D]
    """
    n, d = x.shape
    dtype = x.dtype
    itemsize = jnp.dtype(dtype).itemsize
    # Min sublane multiple for the second-to-last block dim, per dtype width.
    sublane = {4: 8, 2: 16, 1: 32}.get(itemsize, 8)

    # Precompute f32 scale/bias (mirrors the buffers registered in __init__).
    inv_std = 1.0 / jnp.sqrt(var.astype(jnp.float32) + 1e-5)
    scale = inv_std
    bias = -mean.astype(jnp.float32) * inv_std
    sb = jnp.stack([scale, bias], axis=0)  # (2, D) float32

    # --- tile selection ------------------------------------------------------
    # Target ~4 MiB x blocks.  Double-buffered in + out ~= 16 MiB, which fits
    # the explicit 32 MiB vmem_limit below on every generation (v7x physical
    # VMEM is 64 MiB, so 32 MiB scoped leaves headroom).
    target_bytes = 4 * 1024 * 1024
    if block_cols is None:
        if d * sublane * itemsize <= target_bytes:
            # Full-width block: equals the full array dim, so it is always a
            # legal lane dimension (even when D is not a multiple of 128), and
            # the sb slab is DMA'd exactly once.
            block_cols = d
        else:
            block_cols = 2048  # lane-dense multiple of 128; edge block masked
    if block_rows is None:
        rows = max(sublane,
                   (target_bytes // (block_cols * itemsize)) // sublane * sublane)
        # If one block covers all rows, use the exact extent (always legal).
        block_rows = n if rows >= n else rows

    # Grid ordered (col_blocks, row_blocks): the row axis is innermost, so the
    # sb block index (0, j) is constant across the inner loop and its DMA is
    # not re-issued every step.  No padding: boundary blocks are masked.
    grid = (pl.cdiv(d, block_cols), pl.cdiv(n, block_rows))

    bytes_accessed = 2 * n * d * itemsize + 2 * d * 4  # read x + write out + sb

    out = pl.pallas_call(
        _full_batch_norm_kernel,
        out_shape=jax.ShapeDtypeStruct((n, d), dtype),
        grid_spec=pltpu.PrefetchScalarGridSpec(
            num_scalar_prefetch=0,
            grid=grid,
            in_specs=[
                pl.BlockSpec((block_rows, block_cols), lambda j, i: (i, j)),
                pl.BlockSpec((2, block_cols), lambda j, i: (0, j)),
            ],
            out_specs=pl.BlockSpec((block_rows, block_cols), lambda j, i: (i, j)),
        ),
        compiler_params=pltpu.CompilerParams(
            dimension_semantics=("parallel", "parallel"),
            vmem_limit_bytes=32 << 20,
        ),
        cost_estimate=pl.CostEstimate(
            flops=2 * n * d,
            transcendentals=0,
            bytes_accessed=bytes_accessed,
        ),
    )(x, sb)

    return out


if __name__ == "__main__":
    key = jax.random.PRNGKey(0)
    k_x, k_m, k_v, k_x2, k_m2, k_v2 = jax.random.split(key, 6)

    # Small batch of flattened feature vectors (matches the linear-eval usage).
    N, D = 8, 32
    x = jax.random.normal(k_x, (N, D), dtype=jnp.float32)
    mean = jax.random.normal(k_m, (D,), dtype=jnp.float32)
    var = jax.random.uniform(k_v, (D,), dtype=jnp.float32, minval=0.1, maxval=2.0)

    out = full_batch_norm(x, mean, var)
    out = jax.block_until_ready(out)

    ref = (x - mean[None, :]) * (1.0 / jnp.sqrt(var[None, :] + 1e-5))
    assert out.shape == (N, D)
    assert jnp.allclose(out, ref, atol=1e-5, rtol=1e-5), "mismatch vs reference"

    # Second check: ragged / non-aligned shapes exercise the masked-boundary path
    # (no wrapper-side padding or slicing anymore).
    N2, D2 = 10, 200
    x2 = jax.random.normal(k_x2, (N2, D2), dtype=jnp.float32)
    mean2 = jax.random.normal(k_m2, (D2,), dtype=jnp.float32)
    var2 = jax.random.uniform(k_v2, (D2,), dtype=jnp.float32, minval=0.1, maxval=2.0)

    out2 = full_batch_norm(x2, mean2, var2)
    out2 = jax.block_until_ready(out2)

    ref2 = (x2 - mean2[None, :]) * (1.0 / jnp.sqrt(var2[None, :] + 1e-5))
    assert out2.shape == (N2, D2)
    assert jnp.allclose(out2, ref2, atol=1e-5, rtol=1e-5), "mismatch vs reference (ragged)"

    print("KERNEL_OK")
</pallas_src>

<mosaic_0001>
module attributes {stable_mosaic.version = 11 : i64} {
  func.func @_full_batch_norm_kernel(%arg0: i32, %arg1: i32, %arg2: memref<8x32xf32, #tpu.memory_space<vmem>>, %arg3: memref<2x32xf32, #tpu.memory_space<vmem>>, %arg4: memref<8x32xf32, #tpu.memory_space<vmem>>) attributes {dimension_semantics = [#tpu.dimension_semantics<parallel>, #tpu.dimension_semantics<parallel>], iteration_bounds = array<i64: 1, 1>, scalar_prefetch = 0 : i64, scratch_operands = 0 : i64, tpu.core_type = #tpu.core_type<tc>, window_params = [{transform_indices = @transform_0, window_bounds = array<i64: 8, 32>}, {transform_indices = @transform_1, window_bounds = array<i64: 2, 32>}, {transform_indices = @transform_2, window_bounds = array<i64: 8, 32>}]} {
    %c0 = arith.constant 0 : index
    %c0_0 = arith.constant 0 : index
    %0 = vector.load %arg3[%c0, %c0_0] : memref<2x32xf32, #tpu.memory_space<vmem>>, vector<1x32xf32>
    %c1 = arith.constant 1 : index
    %c0_1 = arith.constant 0 : index
    %1 = vector.load %arg3[%c1, %c0_1] : memref<2x32xf32, #tpu.memory_space<vmem>>, vector<1x32xf32>
    %c0_2 = arith.constant 0 : index
    %c0_3 = arith.constant 0 : index
    %2 = vector.load %arg2[%c0_2, %c0_3] : memref<8x32xf32, #tpu.memory_space<vmem>>, vector<8x32xf32>
    %3 = vector.broadcast %0 : vector<1x32xf32> to vector<8x32xf32>
    %4 = arith.mulf %2, %3 : vector<8x32xf32>
    %5 = vector.broadcast %1 : vector<1x32xf32> to vector<8x32xf32>
    %6 = arith.addf %4, %5 : vector<8x32xf32>
    %c0_4 = arith.constant 0 : index
    %c0_5 = arith.constant 0 : index
    %7 = vector.load %arg4[%c0_4, %c0_5] : memref<8x32xf32, #tpu.memory_space<vmem>>, vector<8x32xf32>
    tpu.vector_store %arg4[%c0_4, %c0_5], %6 {strides = array<i32>} : memref<8x32xf32, #tpu.memory_space<vmem>>, vector<8x32xf32>,
    return
  }
  func.func @transform_0(%arg0: i32, %arg1: i32) -> (i32, i32) {
    %c0_i32 = arith.constant 0 : i32
    return %arg1, %arg0 : i32, i32
  }
  func.func @transform_1(%arg0: i32, %arg1: i32) -> (i32, i32) {
    %c0_i32 = arith.constant 0 : i32
    %c0_i32_0 = arith.constant 0 : i32
    return %c0_i32, %arg0 : i32, i32
  }
  func.func @transform_2(%arg0: i32, %arg1: i32) -> (i32, i32) {
    %c0_i32 = arith.constant 0 : i32
    return %arg1, %arg0 : i32, i32
  }
}

</mosaic_0001>

<llo_original>
// kernel: tpu_custom_call.1
$region0: #{tpu_custom_call.1}
  #allocation0 [shape = 'u32[]', space=smem, size = 0x4, offset = 0x4, fixed_abs, tag = 'smem constant byte address 0x4 - core index']
  #allocation1 [shape = 'u32[144,128]{1,0:T(1,128)}', space=vmem, size = 0x12000, scoped, tag = 'internal scratch']
  %s0 = inlined_call_operand.hbm [shape: f32[8,32], index: 0, kind: input, shape index: {}]
  %s1 = inlined_call_operand.vmem [shape: f32[2,32], index: 1, kind: input, shape index: {}]
  %s2 = inlined_call_operand.hbm [shape: f32[8,32], index: 2, kind: output, shape index: {}]
  %s3 = sld [smem:[#allocation0]]
  $region22: #{tpu_custom_call.1} parent=0
    _
  %s5 = ssub.s32 1, %s3
  %s6 = scalar_select 0, %s5, %s3
  $region1: #{tpu_custom_call.1} parent=0
    #allocation2 [shape = 'u8[4096]{0}', space=vmem, size = 0x1000, scoped, tag = 'input window, operand 0, single buffered']
    #allocation3 [shape = 's32[1]{0}', space=sflag, size = 0x4, scoped, tag = 'scoped memory for tpu_custom_call.1']
    #allocation4 [shape = 's32[1]{0}', space=sflag, size = 0x4, scoped, tag = 'scoped memory for tpu_custom_call.1']
    #allocation5 [shape = 'u8[4096]{0}', space=vmem, size = 0x1000, scoped, tag = 'output window, operand 0, single buffered']
    %7 = vsyncpa [#allocation3], 0
    %8 = vsyncpa [#allocation4], 0
    // Predicated region
    $region2: #{tpu_custom_call.1} parent=1 // pred_check
      _
    $region3: #{tpu_custom_call.1} parent=1 // pred_check_branch
      %10 = sbr.rel (0) target = $region5
    $region4: #{tpu_custom_call.1} parent=1 // pred_region
      %s12 = ssub.s32 128, 128
      %13 = vsyncadd [#allocation3], %s12
      %s15 = sshll.u32 [#allocation2], 4
      %s16 = int_to_ptr.vmem [resolvable:$true] %s15
      %18 = dma.hbm_to_vmem [thread:$0]  %s0, 128, %s16, [#allocation3]
    $region5: #{tpu_custom_call.1} parent=1 // pred_fallthru
      _
    // Predicated region
    $region6: #{tpu_custom_call.1} parent=1 // pred_check
      _
    $region7: #{tpu_custom_call.1} parent=1 // pred_check_branch
      %20 = sbr.rel (0) target = $region9
    $region8: #{tpu_custom_call.1} parent=1 // pred_region
      _
    $region9: #{tpu_custom_call.1} parent=1 // pred_fallthru
      _
    // Predicated region
    $region10: #{tpu_custom_call.1} parent=1 // pred_check
      _
    $region11: #{tpu_custom_call.1} parent=1 // pred_check_branch
      %22 = sbr.rel (0) target = $region13
    $region12: #{tpu_custom_call.1} parent=1 // pred_region
      %23 = dma.done [#allocation3], 128
    $region13: #{tpu_custom_call.1} parent=1 // pred_fallthru
      _
    %v24 = vld [vmem:[%s1] sm:$0x1]
    %v25 = vld [vmem:[%s1 + $0x1] sm:$0x1]
    %v26 = vld [vmem:[#allocation2] sm:$0xff]
    %v27 = vlaneseq
    %v28 = vshrl.u32 %v27, 7
    %v29 = vsub.s32 0, %v28
    %v30 = vrot.slane %v24, %v29
    %v31 = vmul.f32 %v26, %v30
    %v32 = vlaneseq
    %v33 = vshrl.u32 %v32, 7
    %v34 = vsub.s32 0, %v33
    %v35 = vrot.slane %v25, %v34
    %v36 = vadd.f32 %v31, %v35
    %vm37 = vcmask 261120
    %38 = vst.msk [vmem:[#allocation5] sm:$0xff] %vm37, %v36
    // Predicated region
    $region14: #{tpu_custom_call.1} parent=1 // pred_check
      _
    $region15: #{tpu_custom_call.1} parent=1 // pred_check_branch
      %40 = sbr.rel (0) target = $region17
    $region16: #{tpu_custom_call.1} parent=1 // pred_region
      %s42 = ssub.s32 128, 128
      %43 = vsyncadd [#allocation4], %s42
      %s45 = sshll.u32 [#allocation5], 4
      %s46 = int_to_ptr.vmem [resolvable:$true] %s45
      %48 = dma.vmem_to_hbm [thread:$0]  %s46, 128, %s2, [#allocation4]
    $region17: #{tpu_custom_call.1} parent=1 // pred_fallthru
      _
    // Predicated region
    $region18: #{tpu_custom_call.1} parent=1 // pred_check
      _
    $region19: #{tpu_custom_call.1} parent=1 // pred_check_branch
      %50 = sbr.rel (0) target = $region21
    $region20: #{tpu_custom_call.1} parent=1 // pred_region
      %51 = dma.done [#allocation4], 128
    $region21: #{tpu_custom_call.1} parent=1 // pred_fallthru
      _
    %52 = vsyncpa [#allocation3], 1
    %53 = vsyncpa [#allocation4], 1

</llo_original>
